<compile_context>
chip_gen: v5e
topology: v5e:2x2
jax: 0.10.0
libtpu: 0.0.40
codegen_flags: <defaults>
</compile_context>

<pallas_src>
import math
import numpy as np
import jax
import jax.numpy as jnp
from jax.experimental import pallas as pl
from jax.experimental.pallas import tpu as pltpu

# ----- synthetic config (small) ------------------------------------------------
B, S = 2, 8
N_EMBD = 32
N_HEAD = 4
HEAD_DIM = N_EMBD // N_HEAD          # 8
MP_NUM = 4
N_CTX = 64
ROTARY_DIM = min(4, N_CTX // N_HEAD)  # 4 (even)
INNER = 4 * N_EMBD                    # 128
LN_EPS = 1e-5
LOCAL = N_EMBD // MP_NUM              # local_dim = head_dim * n_head / mp_num
HEADS_PER_MP = N_HEAD // MP_NUM

BS = B * S                            # batch folded into matmul rows: 16
QKV_W = 5 * N_EMBD                    # q | q_rot | k | k_rot | v = 160 lanes
FC_IN0 = 2 * 128                      # fc_in starts on a vreg boundary (lane 256)
FUSED_PAD = FC_IN0 + INNER            # fused projection width = 384 lanes

# packed-table column layout (tab is (BS, 128))
_COS0 = 0
_SIN0 = N_EMBD                        # 32
_MASK0 = 2 * N_EMBD                   # 64: causal additive (S,S) mask in rows 0..S-1
_BOUT0 = 2 * N_EMBD + S               # 72: fc_out bias, replicated over rows
TAB_W = 128


# ----- Pallas kernel: whole block, batch folded into rows ----------------------
def codegen_block_kernel(x_ref, w_in_ref, b_in_ref, w_out_ref, tab_ref, o_ref):
    x = x_ref[...]                                            # (BS, E) f32

    # --- ln_1 core (affine is folded into the fused projection weight/bias) ---
    mean = jnp.mean(x, axis=-1, keepdims=True)
    xc = x - mean
    var = jnp.mean(xc * xc, axis=-1, keepdims=True)
    norm = xc * jax.lax.rsqrt(var + LN_EPS)                   # (BS, E)

    # --- single fused projection: one lane-dense MXU push for q*scale,
    #     rotate(q)*scale, k, rotate(k), v and fc_in ---
    z = jnp.dot(norm, w_in_ref[...], preferred_element_type=jnp.float32)
    z = z + b_in_ref[...]                                     # (BS, FUSED_PAD)

    tab = tab_ref[...]                                        # (BS, 128)
    cos = tab[:, _COS0:_COS0 + N_EMBD]
    sin = tab[:, _SIN0:_SIN0 + N_EMBD]
    mask = tab[0:S, _MASK0:_MASK0 + S]                        # (S, S) 0 / -1e30 causal
    b_out = tab[:, _BOUT0:_BOUT0 + N_EMBD]                    # fc_out bias (replicated)

    # --- GPT-J interleaved rotary with pre-folded rotation weights: VPU only ---
    q = z[:, 0:N_EMBD] * cos + z[:, N_EMBD:2 * N_EMBD] * sin  # already * head_dim**-0.5
    k = z[:, 2 * N_EMBD:3 * N_EMBD] * cos + z[:, 3 * N_EMBD:4 * N_EMBD] * sin
    v = z[:, 4 * N_EMBD:5 * N_EMBD]
    m = z[:, FC_IN0:FC_IN0 + INNER]                           # vreg-aligned (16,128) view

    # --- MLP (gelu_new -> fc_out), fed by the SAME ln_1 output (parallel block) ---
    c0 = math.sqrt(2.0 / math.pi)
    m = 0.5 * m * (1.0 + jnp.tanh(c0 * (m + 0.044715 * m * m * m)))
    w_out = w_out_ref[...]                                    # (E + INNER, E): [out_proj ; fc_out]
    y = x + b_out + jnp.dot(m, w_out[N_EMBD:, :], preferred_element_type=jnp.float32)

    # --- causal attention: per head, batched over B (per-batch (S,S) scores,
    #     no cross-batch garbage); per-head PV outputs are assembled and pushed
    #     through out_proj with ONE merged matmul (no serial pop->add chain). ---
    oh_parts = []
    for hd in range(N_HEAD):
        sl = slice(hd * HEAD_DIM, (hd + 1) * HEAD_DIM)
        qh = q[:, sl].reshape(B, S, HEAD_DIM)
        kh = k[:, sl].reshape(B, S, HEAD_DIM)
        vh = v[:, sl].reshape(B, S, HEAD_DIM)
        s = jnp.einsum('bqd,bkd->bqk', qh, kh,
                       preferred_element_type=jnp.float32)    # (B, S, S)
        s = s + mask
        s = s - jnp.max(s, axis=-1, keepdims=True)
        p = jnp.exp(s)
        p = p * pl.reciprocal(jnp.sum(p, axis=-1, keepdims=True), approx=True)
        oh = jnp.einsum('bqk,bkd->bqd', p, vh,
                        preferred_element_type=jnp.float32)   # (B, S, D)
        oh_parts.append(oh.reshape(BS, HEAD_DIM))
    o_all = jnp.concatenate(oh_parts, axis=-1)                # (BS, E)
    y = y + jnp.dot(o_all, w_out[:N_EMBD, :], preferred_element_type=jnp.float32)

    # TODO(synk): output last dim is 32 (<128) so this is a masked vst; at 512
    #             total elements the relayout needed for a 128-wide slab would
    #             cost as much as the masked store, so it is kept as-is.
    o_ref[...] = y


# ----- wrapper ------------------------------------------------------------------
def codegen_flash_block(x, params):
    f32 = jnp.float32
    ln_w, ln_b = params["ln_w"].astype(f32), params["ln_b"].astype(f32)

    # CodeGen mp_num=4 column interleave -> per-head contiguous q / v / k columns.
    w_qkv_t = params["w_qkv"].T                               # (E, 3E)
    q_cols, v_cols, k_cols = [], [], []
    for hd in range(N_HEAD):
        mp, r = hd // HEADS_PER_MP, hd % HEADS_PER_MP
        base = mp * 3 * LOCAL
        for d in range(HEAD_DIM):
            inner = r * HEAD_DIM + d
            q_cols.append(base + inner)
            v_cols.append(base + LOCAL + inner)
            k_cols.append(base + 2 * LOCAL + inner)
    wq = w_qkv_t[:, jnp.array(q_cols)]
    wk = w_qkv_t[:, jnp.array(k_cols)]
    wv = w_qkv_t[:, jnp.array(v_cols)]

    # Rotary tables; rotate_every_two expressed as a matrix so it can be folded
    # into the projection weights (removes the in-kernel rot matmuls).
    inv_freq = 1.0 / (10000.0 ** (np.arange(0, ROTARY_DIM, 2) / ROTARY_DIM))
    sinusoid = np.arange(S)[:, None] * inv_freq[None, :]               # (S, ROT/2)
    sin_i = np.repeat(np.sin(sinusoid), 2, axis=-1).astype(np.float32)
    cos_i = np.repeat(np.cos(sinusoid), 2, axis=-1).astype(np.float32)
    sin_full = np.zeros((S, N_EMBD), np.float32)
    cos_full = np.ones((S, N_EMBD), np.float32)
    rot_mat = np.zeros((N_EMBD, N_EMBD), np.float32)
    for hd in range(N_HEAD):
        base = hd * HEAD_DIM
        sin_full[:, base:base + ROTARY_DIM] = sin_i
        cos_full[:, base:base + ROTARY_DIM] = cos_i
        for i in range(0, ROTARY_DIM, 2):
            rot_mat[base + i + 1, base + i] = -1.0   # out[:,2i]   = -x[:,2i+1]
            rot_mat[base + i, base + i + 1] = 1.0    # out[:,2i+1] =  x[:,2i]
    rot = jnp.asarray(rot_mat)

    # Fused input projection, vreg-aligned layout:
    #   [q*scale | q@rot*scale | k | k@rot | v | zero-pad to lane 256 | fc_in]
    # ln_1 affine folded (rows scaled by ln_w, ln_b folded into the bias),
    # attention scale folded into the q columns, fc_in bias appended.
    scale = HEAD_DIM ** -0.5
    pad_mid = FC_IN0 - QKV_W                                           # 96 zero lanes
    w_stack = jnp.concatenate(
        [wq * scale, (wq @ rot) * scale, wk, wk @ rot, wv,
         jnp.zeros((N_EMBD, pad_mid), f32), params["w_fc_in"].T],
        axis=1)                                                        # (E, 384)
    b_extra = jnp.concatenate([jnp.zeros((QKV_W + pad_mid,), f32),
                               params["b_fc_in"].astype(f32)])         # (384,)
    w_in = ln_w[:, None] * w_stack                                     # (E, 384)
    b_in = (ln_b @ w_stack + b_extra)[None, :]                         # (1, 384)

    # Stacked output-side weights: [attention out_proj ; mlp fc_out].
    w_out = jnp.concatenate([params["w_out"].T, params["w_fc_out"].T], axis=0)  # (E+INNER, E)

    # Packed tables (one lane-dense operand): cos | sin | causal mask | b_fc_out.
    tab = np.zeros((BS, TAB_W), np.float32)
    tab[:, _COS0:_COS0 + N_EMBD] = np.tile(cos_full, (B, 1))
    tab[:, _SIN0:_SIN0 + N_EMBD] = np.tile(sin_full, (B, 1))
    causal = np.tril(np.ones((S, S), dtype=bool))
    tab[0:S, _MASK0:_MASK0 + S] = np.where(causal, 0.0, -1e30)
    tab[:, _BOUT0:_BOUT0 + N_EMBD] = np.asarray(params["b_fc_out"])[None, :]
    tab = jnp.asarray(tab)

    x2d = x.reshape(BS, N_EMBD)

    def full(shape):
        return pl.BlockSpec(shape, lambda i: (0,) * len(shape))

    # Single grid step: batch folded into the matmul M dimension (best on the
    # single-TensorCore v5e/v6e).
    # TODO(synk): on v7x use grid=(B,) + dimension_semantics=("parallel",) so
    #             each of the 2 TensorCores takes one batch element.
    out = pl.pallas_call(
        codegen_block_kernel,
        out_shape=jax.ShapeDtypeStruct((BS, N_EMBD), jnp.float32),
        grid_spec=pltpu.PrefetchScalarGridSpec(
            num_scalar_prefetch=0,
            grid=(1,),
            in_specs=[full((BS, N_EMBD)),
                      full((N_EMBD, FUSED_PAD)),
                      full((1, FUSED_PAD)),
                      full((N_EMBD + INNER, N_EMBD)),
                      full((BS, TAB_W))],
            out_specs=full((BS, N_EMBD)),
        ),
        compiler_params=pltpu.CompilerParams(dimension_semantics=("arbitrary",)),
    )(x2d, w_in, b_in, w_out, tab)
    return out.reshape(B, S, N_EMBD)


# ----- pure-JAX reference (mirrors the PyTorch forward) --------------------------
def reference(x, p):
    mean = x.mean(-1, keepdims=True)
    var = ((x - mean) ** 2).mean(-1, keepdims=True)
    h = (x - mean) / jnp.sqrt(var + LN_EPS) * p["ln_w"] + p["ln_b"]

    qkv = h @ p["w_qkv"].T                                    # (B, S, 3E)
    qkv = qkv.reshape(B, S, MP_NUM, 3 * LOCAL)
    q, v, k = qkv[..., :LOCAL], qkv[..., LOCAL:2 * LOCAL], qkv[..., 2 * LOCAL:]

    def split_heads(t):
        t = t.reshape(B, S, MP_NUM, HEADS_PER_MP, HEAD_DIM)
        return t.reshape(B, S, N_HEAD, HEAD_DIM)

    q, k, v = map(split_heads, (q, k, v))

    inv_freq = 1.0 / (10000.0 ** (np.arange(0, ROTARY_DIM, 2) / ROTARY_DIM))
    sinusoid = np.arange(S)[:, None] * inv_freq[None, :]
    sin = jnp.asarray(np.repeat(np.sin(sinusoid), 2, -1), jnp.float32)[None, :, None, :]
    cos = jnp.asarray(np.repeat(np.cos(sinusoid), 2, -1), jnp.float32)[None, :, None, :]

    def rope(t):
        tr, tp = t[..., :ROTARY_DIM], t[..., ROTARY_DIM:]
        x1, x2 = tr[..., ::2], tr[..., 1::2]
        rot = jnp.stack([-x2, x1], axis=-1).reshape(tr.shape)
        return jnp.concatenate([tr * cos + rot * sin, tp], axis=-1)

    q, k = rope(q), rope(k)
    scale = 1.0 / math.sqrt(HEAD_DIM)
    s = jnp.einsum("bqhd,bkhd->bhqk", q, k) * scale
    s = jnp.where(np.tril(np.ones((S, S), bool)), s, -1e30)
    attn_p = jax.nn.softmax(s, axis=-1)
    o = jnp.einsum("bhqk,bkhd->bqhd", attn_p, v).reshape(B, S, N_EMBD)
    attn = o @ p["w_out"].T

    m = h @ p["w_fc_in"].T + p["b_fc_in"]
    m = 0.5 * m * (1.0 + jnp.tanh(math.sqrt(2.0 / math.pi) * (m + 0.044715 * m ** 3)))
    m = m @ p["w_fc_out"].T + p["b_fc_out"]
    return attn + m + x


# ----- main -----------------------------------------------------------------------
if __name__ == "__main__":
    key = jax.random.PRNGKey(0)
    ks = jax.random.split(key, 8)
    params = {
        "ln_w": 1.0 + 0.1 * jax.random.normal(ks[0], (N_EMBD,), jnp.float32),
        "ln_b": 0.1 * jax.random.normal(ks[1], (N_EMBD,), jnp.float32),
        "w_qkv": 0.05 * jax.random.normal(ks[2], (3 * N_EMBD, N_EMBD), jnp.float32),
        "w_out": 0.05 * jax.random.normal(ks[3], (N_EMBD, N_EMBD), jnp.float32),
        "w_fc_in": 0.05 * jax.random.normal(ks[4], (INNER, N_EMBD), jnp.float32),
        "b_fc_in": 0.05 * jax.random.normal(ks[5], (INNER,), jnp.float32),
        "w_fc_out": 0.05 * jax.random.normal(ks[6], (N_EMBD, INNER), jnp.float32),
        "b_fc_out": 0.05 * jax.random.normal(ks[7], (N_EMBD,), jnp.float32),
    }
    x = jax.random.normal(jax.random.PRNGKey(42), (B, S, N_EMBD), jnp.float32)

    out = jax.block_until_ready(codegen_flash_block(x, params))
    ref = jax.block_until_ready(reference(x, params))
    np.testing.assert_allclose(np.asarray(out), np.asarray(ref), rtol=2e-3, atol=2e-3)
    print("KERNEL_OK")
</pallas_src>

<mosaic_0001>
module attributes {stable_mosaic.version = 11 : i64} {
  func.func @codegen_block_kernel(%arg0: i32, %arg1: memref<16x32xf32, #tpu.memory_space<vmem>>, %arg2: memref<32x384xf32, #tpu.memory_space<vmem>>, %arg3: memref<1x384xf32, #tpu.memory_space<vmem>>, %arg4: memref<160x32xf32, #tpu.memory_space<vmem>>, %arg5: memref<16x128xf32, #tpu.memory_space<vmem>>, %arg6: memref<16x32xf32, #tpu.memory_space<vmem>>) attributes {dimension_semantics = [#tpu.dimension_semantics<arbitrary>], iteration_bounds = array<i64: 1>, scalar_prefetch = 0 : i64, scratch_operands = 0 : i64, tpu.core_type = #tpu.core_type<tc>, window_params = [{pipeline_mode = #tpu.pipeline_mode<synchronous>, transform_indices = @transform_0, window_bounds = array<i64: 16, 32>}, {pipeline_mode = #tpu.pipeline_mode<synchronous>, transform_indices = @transform_1, window_bounds = array<i64: 32, 384>}, {pipeline_mode = #tpu.pipeline_mode<synchronous>, transform_indices = @transform_2, window_bounds = array<i64: 1, 384>}, {pipeline_mode = #tpu.pipeline_mode<synchronous>, transform_indices = @transform_3, window_bounds = array<i64: 160, 32>}, {pipeline_mode = #tpu.pipeline_mode<synchronous>, transform_indices = @transform_4, window_bounds = array<i64: 16, 128>}, {pipeline_mode = #tpu.pipeline_mode<synchronous>, transform_indices = @transform_5, window_bounds = array<i64: 16, 32>}]} {
    %c0 = arith.constant 0 : index
    %c0_0 = arith.constant 0 : index
    %0 = vector.load %arg1[%c0, %c0_0] : memref<16x32xf32, #tpu.memory_space<vmem>>, vector<16x32xf32>
    %cst = arith.constant dense<0.000000e+00> : vector<16xf32>
    %1 = vector.multi_reduction <add>, %0, %cst [1] : vector<16x32xf32> to vector<16xf32>
    %2 = vector.shape_cast %1 : vector<16xf32> to vector<16x1xf32>
    %cst_1 = arith.constant 3.200000e+01 : f32
    %3 = vector.broadcast %cst_1 : f32 to vector<16x1xf32>
    %4 = arith.divf %2, %3 : vector<16x1xf32>
    %5 = vector.broadcast %4 : vector<16x1xf32> to vector<16x32xf32>
    %6 = arith.subf %0, %5 : vector<16x32xf32>
    %7 = arith.mulf %6, %6 : vector<16x32xf32>
    %cst_2 = arith.constant dense<0.000000e+00> : vector<16xf32>
    %8 = vector.multi_reduction <add>, %7, %cst_2 [1] : vector<16x32xf32> to vector<16xf32>
    %9 = vector.shape_cast %8 : vector<16xf32> to vector<16x1xf32>
    %cst_3 = arith.constant 3.200000e+01 : f32
    %10 = vector.broadcast %cst_3 : f32 to vector<16x1xf32>
    %11 = arith.divf %9, %10 : vector<16x1xf32>
    %cst_4 = arith.constant 9.99999974E-6 : f32
    %12 = vector.broadcast %cst_4 : f32 to vector<16x1xf32>
    %13 = arith.addf %11, %12 : vector<16x1xf32>
    %14 = math.rsqrt %13 : vector<16x1xf32>
    %15 = vector.broadcast %14 : vector<16x1xf32> to vector<16x32xf32>
    %16 = arith.mulf %6, %15 : vector<16x32xf32>
    %c0_5 = arith.constant 0 : index
    %c0_6 = arith.constant 0 : index
    %17 = vector.load %arg2[%c0_5, %c0_6] : memref<32x384xf32, #tpu.memory_space<vmem>>, vector<32x384xf32>
    %cst_7 = arith.constant dense<0.000000e+00> : vector<16x384xf32>
    %18 = tpu.matmul %16, %17, %cst_7 {dimension_numbers = #tpu.dot_dimension_numbers<[1], [0], [0], [1], [0, 0, 1, 1], [], []>} : vector<16x32xf32>, vector<32x384xf32>, vector<16x384xf32> -> vector<16x384xf32>
    %c0_8 = arith.constant 0 : index
    %c0_9 = arith.constant 0 : index
    %19 = vector.load %arg3[%c0_8, %c0_9] : memref<1x384xf32, #tpu.memory_space<vmem>>, vector<1x384xf32>
    %20 = vector.broadcast %19 : vector<1x384xf32> to vector<16x384xf32>
    %21 = arith.addf %18, %20 : vector<16x384xf32>
    %c0_10 = arith.constant 0 : index
    %c0_11 = arith.constant 0 : index
    %22 = vector.load %arg5[%c0_10, %c0_11] : memref<16x128xf32, #tpu.memory_space<vmem>>, vector<16x128xf32>
    %23 = vector.extract_strided_slice %22 {offsets = [0, 0], sizes = [16, 32], strides = [1, 1]} : vector<16x128xf32> to vector<16x32xf32>
    %24 = vector.extract_strided_slice %22 {offsets = [0, 32], sizes = [16, 32], strides = [1, 1]} : vector<16x128xf32> to vector<16x32xf32>
    %25 = vector.extract_strided_slice %22 {offsets = [0, 64], sizes = [8, 8], strides = [1, 1]} : vector<16x128xf32> to vector<8x8xf32>
    %26 = vector.extract_strided_slice %22 {offsets = [0, 72], sizes = [16, 32], strides = [1, 1]} : vector<16x128xf32> to vector<16x32xf32>
    %27 = vector.extract_strided_slice %21 {offsets = [0, 0], sizes = [16, 32], strides = [1, 1]} : vector<16x384xf32> to vector<16x32xf32>
    %28 = arith.mulf %27, %23 : vector<16x32xf32>
    %29 = vector.extract_strided_slice %21 {offsets = [0, 32], sizes = [16, 32], strides = [1, 1]} : vector<16x384xf32> to vector<16x32xf32>
    %30 = arith.mulf %29, %24 : vector<16x32xf32>
    %31 = arith.addf %28, %30 : vector<16x32xf32>
    %32 = vector.extract_strided_slice %21 {offsets = [0, 64], sizes = [16, 32], strides = [1, 1]} : vector<16x384xf32> to vector<16x32xf32>
    %33 = arith.mulf %32, %23 : vector<16x32xf32>
    %34 = vector.extract_strided_slice %21 {offsets = [0, 96], sizes = [16, 32], strides = [1, 1]} : vector<16x384xf32> to vector<16x32xf32>
    %35 = arith.mulf %34, %24 : vector<16x32xf32>
    %36 = arith.addf %33, %35 : vector<16x32xf32>
    %37 = vector.extract_strided_slice %21 {offsets = [0, 128], sizes = [16, 32], strides = [1, 1]} : vector<16x384xf32> to vector<16x32xf32>
    %38 = vector.extract_strided_slice %21 {offsets = [0, 256], sizes = [16, 128], strides = [1, 1]} : vector<16x384xf32> to vector<16x128xf32>
    %cst_12 = arith.constant 5.000000e-01 : f32
    %39 = vector.broadcast %cst_12 : f32 to vector<16x128xf32>
    %40 = arith.mulf %39, %38 : vector<16x128xf32>
    %cst_13 = arith.constant 4.471500e-02 : f32
    %41 = vector.broadcast %cst_13 : f32 to vector<16x128xf32>
    %42 = arith.mulf %41, %38 : vector<16x128xf32>
    %43 = arith.mulf %42, %38 : vector<16x128xf32>
    %44 = arith.mulf %43, %38 : vector<16x128xf32>
    %45 = arith.addf %38, %44 : vector<16x128xf32>
    %cst_14 = arith.constant 0.797884583 : f32
    %46 = vector.broadcast %cst_14 : f32 to vector<16x128xf32>
    %47 = arith.mulf %46, %45 : vector<16x128xf32>
    %48 = math.tanh %47 : vector<16x128xf32>
    %cst_15 = arith.constant 1.000000e+00 : f32
    %49 = vector.broadcast %cst_15 : f32 to vector<16x128xf32>
    %50 = arith.addf %49, %48 : vector<16x128xf32>
    %51 = arith.mulf %40, %50 : vector<16x128xf32>
    %c0_16 = arith.constant 0 : index
    %c0_17 = arith.constant 0 : index
    %52 = vector.load %arg4[%c0_16, %c0_17] : memref<160x32xf32, #tpu.memory_space<vmem>>, vector<160x32xf32>
    %53 = arith.addf %0, %26 : vector<16x32xf32>
    %54 = vector.extract_strided_slice %52 {offsets = [32, 0], sizes = [128, 32], strides = [1, 1]} : vector<160x32xf32> to vector<128x32xf32>
    %cst_18 = arith.constant dense<0.000000e+00> : vector<16x32xf32>
    %55 = tpu.matmul %51, %54, %cst_18 {dimension_numbers = #tpu.dot_dimension_numbers<[1], [0], [0], [1], [0, 0, 1, 1], [], []>} : vector<16x128xf32>, vector<128x32xf32>, vector<16x32xf32> -> vector<16x32xf32>
    %56 = arith.addf %53, %55 : vector<16x32xf32>
    %57 = vector.extract_strided_slice %31 {offsets = [0, 0], sizes = [16, 8], strides = [1, 1]} : vector<16x32xf32> to vector<16x8xf32>
    %58 = vector.shape_cast %57 : vector<16x8xf32> to vector<2x8x8xf32>
    %59 = vector.extract_strided_slice %36 {offsets = [0, 0], sizes = [16, 8], strides = [1, 1]} : vector<16x32xf32> to vector<16x8xf32>
    %60 = vector.shape_cast %59 : vector<16x8xf32> to vector<2x8x8xf32>
    %61 = vector.extract_strided_slice %37 {offsets = [0, 0], sizes = [16, 8], strides = [1, 1]} : vector<16x32xf32> to vector<16x8xf32>
    %62 = vector.shape_cast %61 : vector<16x8xf32> to vector<2x8x8xf32>
    "tpu.trace_start"() <{level = 10 : i32, message = "bqd,bkd->bqk"}> : () -> ()
    %cst_19 = arith.constant dense<0.000000e+00> : vector<2x8x8xf32>
    %63 = tpu.matmul %58, %60, %cst_19 {dimension_numbers = #tpu.dot_dimension_numbers<[2], [2], [1], [1], [0, 0, 0, 1, 1, 1], [0], [0]>} : vector<2x8x8xf32>, vector<2x8x8xf32>, vector<2x8x8xf32> -> vector<2x8x8xf32>
    "tpu.trace_stop"() : () -> ()
    %64 = vector.shape_cast %25 : vector<8x8xf32> to vector<1x8x8xf32>
    %65 = vector.broadcast %64 : vector<1x8x8xf32> to vector<2x8x8xf32>
    %66 = arith.addf %63, %65 : vector<2x8x8xf32>
    %cst_20 = arith.constant dense<0xFF800000> : vector<2x8xf32>
    %67 = vector.multi_reduction <maximumf>, %66, %cst_20 [2] : vector<2x8x8xf32> to vector<2x8xf32>
    %68 = vector.shape_cast %67 : vector<2x8xf32> to vector<2x8x1xf32>
    %69 = vector.broadcast %68 : vector<2x8x1xf32> to vector<2x8x8xf32>
    %70 = arith.subf %66, %69 : vector<2x8x8xf32>
    %71 = math.exp %70 : vector<2x8x8xf32>
    %cst_21 = arith.constant dense<0.000000e+00> : vector<2x8xf32>
    %72 = vector.multi_reduction <add>, %71, %cst_21 [2] : vector<2x8x8xf32> to vector<2x8xf32>
    %73 = vector.shape_cast %72 : vector<2x8xf32> to vector<2x8x1xf32>
    %74 = tpu.reciprocal %73 {approx = true} : vector<2x8x1xf32> -> vector<2x8x1xf32>
    %75 = vector.broadcast %74 : vector<2x8x1xf32> to vector<2x8x8xf32>
    %76 = arith.mulf %71, %75 : vector<2x8x8xf32>
    "tpu.trace_start"() <{level = 10 : i32, message = "bqk,bkd->bqd"}> : () -> ()
    %cst_22 = arith.constant dense<0.000000e+00> : vector<2x8x8xf32>
    %77 = tpu.matmul %76, %62, %cst_22 {dimension_numbers = #tpu.dot_dimension_numbers<[2], [1], [1], [2], [0, 0, 0, 1, 1, 2], [0], [0]>} : vector<2x8x8xf32>, vector<2x8x8xf32>, vector<2x8x8xf32> -> vector<2x8x8xf32>
    "tpu.trace_stop"() : () -> ()
    %78 = vector.shape_cast %77 : vector<2x8x8xf32> to vector<16x8xf32>
    %79 = vector.extract_strided_slice %31 {offsets = [0, 8], sizes = [16, 8], strides = [1, 1]} : vector<16x32xf32> to vector<16x8xf32>
    %80 = vector.shape_cast %79 : vector<16x8xf32> to vector<2x8x8xf32>
    %81 = vector.extract_strided_slice %36 {offsets = [0, 8], sizes = [16, 8], strides = [1, 1]} : vector<16x32xf32> to vector<16x8xf32>
    %82 = vector.shape_cast %81 : vector<16x8xf32> to vector<2x8x8xf32>
    %83 = vector.extract_strided_slice %37 {offsets = [0, 8], sizes = [16, 8], strides = [1, 1]} : vector<16x32xf32> to vector<16x8xf32>
    %84 = vector.shape_cast %83 : vector<16x8xf32> to vector<2x8x8xf32>
    "tpu.trace_start"() <{level = 10 : i32, message = "bqd,bkd->bqk"}> : () -> ()
    %cst_23 = arith.constant dense<0.000000e+00> : vector<2x8x8xf32>
    %85 = tpu.matmul %80, %82, %cst_23 {dimension_numbers = #tpu.dot_dimension_numbers<[2], [2], [1], [1], [0, 0, 0, 1, 1, 1], [0], [0]>} : vector<2x8x8xf32>, vector<2x8x8xf32>, vector<2x8x8xf32> -> vector<2x8x8xf32>
    "tpu.trace_stop"() : () -> ()
    %86 = vector.shape_cast %25 : vector<8x8xf32> to vector<1x8x8xf32>
    %87 = vector.broadcast %86 : vector<1x8x8xf32> to vector<2x8x8xf32>
    %88 = arith.addf %85, %87 : vector<2x8x8xf32>
    %cst_24 = arith.constant dense<0xFF800000> : vector<2x8xf32>
    %89 = vector.multi_reduction <maximumf>, %88, %cst_24 [2] : vector<2x8x8xf32> to vector<2x8xf32>
    %90 = vector.shape_cast %89 : vector<2x8xf32> to vector<2x8x1xf32>
    %91 = vector.broadcast %90 : vector<2x8x1xf32> to vector<2x8x8xf32>
    %92 = arith.subf %88, %91 : vector<2x8x8xf32>
    %93 = math.exp %92 : vector<2x8x8xf32>
    %cst_25 = arith.constant dense<0.000000e+00> : vector<2x8xf32>
    %94 = vector.multi_reduction <add>, %93, %cst_25 [2] : vector<2x8x8xf32> to vector<2x8xf32>
    %95 = vector.shape_cast %94 : vector<2x8xf32> to vector<2x8x1xf32>
    %96 = tpu.reciprocal %95 {approx = true} : vector<2x8x1xf32> -> vector<2x8x1xf32>
    %97 = vector.broadcast %96 : vector<2x8x1xf32> to vector<2x8x8xf32>
    %98 = arith.mulf %93, %97 : vector<2x8x8xf32>
    "tpu.trace_start"() <{level = 10 : i32, message = "bqk,bkd->bqd"}> : () -> ()
    %cst_26 = arith.constant dense<0.000000e+00> : vector<2x8x8xf32>
    %99 = tpu.matmul %98, %84, %cst_26 {dimension_numbers = #tpu.dot_dimension_numbers<[2], [1], [1], [2], [0, 0, 0, 1, 1, 2], [0], [0]>} : vector<2x8x8xf32>, vector<2x8x8xf32>, vector<2x8x8xf32> -> vector<2x8x8xf32>
    "tpu.trace_stop"() : () -> ()
    %100 = vector.shape_cast %99 : vector<2x8x8xf32> to vector<16x8xf32>
    %101 = vector.extract_strided_slice %31 {offsets = [0, 16], sizes = [16, 8], strides = [1, 1]} : vector<16x32xf32> to vector<16x8xf32>
    %102 = vector.shape_cast %101 : vector<16x8xf32> to vector<2x8x8xf32>
    %103 = vector.extract_strided_slice %36 {offsets = [0, 16], sizes = [16, 8], strides = [1, 1]} : vector<16x32xf32> to vector<16x8xf32>
    %104 = vector.shape_cast %103 : vector<16x8xf32> to vector<2x8x8xf32>
    %105 = vector.extract_strided_slice %37 {offsets = [0, 16], sizes = [16, 8], strides = [1, 1]} : vector<16x32xf32> to vector<16x8xf32>
    %106 = vector.shape_cast %105 : vector<16x8xf32> to vector<2x8x8xf32>
    "tpu.trace_start"() <{level = 10 : i32, message = "bqd,bkd->bqk"}> : () -> ()
    %cst_27 = arith.constant dense<0.000000e+00> : vector<2x8x8xf32>
    %107 = tpu.matmul %102, %104, %cst_27 {dimension_numbers = #tpu.dot_dimension_numbers<[2], [2], [1], [1], [0, 0, 0, 1, 1, 1], [0], [0]>} : vector<2x8x8xf32>, vector<2x8x8xf32>, vector<2x8x8xf32> -> vector<2x8x8xf32>
    "tpu.trace_stop"() : () -> ()
    %108 = vector.shape_cast %25 : vector<8x8xf32> to vector<1x8x8xf32>
    %109 = vector.broadcast %108 : vector<1x8x8xf32> to vector<2x8x8xf32>
    %110 = arith.addf %107, %109 : vector<2x8x8xf32>
    %cst_28 = arith.constant dense<0xFF800000> : vector<2x8xf32>
    %111 = vector.multi_reduction <maximumf>, %110, %cst_28 [2] : vector<2x8x8xf32> to vector<2x8xf32>
    %112 = vector.shape_cast %111 : vector<2x8xf32> to vector<2x8x1xf32>
    %113 = vector.broadcast %112 : vector<2x8x1xf32> to vector<2x8x8xf32>
    %114 = arith.subf %110, %113 : vector<2x8x8xf32>
    %115 = math.exp %114 : vector<2x8x8xf32>
    %cst_29 = arith.constant dense<0.000000e+00> : vector<2x8xf32>
    %116 = vector.multi_reduction <add>, %115, %cst_29 [2] : vector<2x8x8xf32> to vector<2x8xf32>
    %117 = vector.shape_cast %116 : vector<2x8xf32> to vector<2x8x1xf32>
    %118 = tpu.reciprocal %117 {approx = true} : vector<2x8x1xf32> -> vector<2x8x1xf32>
    %119 = vector.broadcast %118 : vector<2x8x1xf32> to vector<2x8x8xf32>
    %120 = arith.mulf %115, %119 : vector<2x8x8xf32>
    "tpu.trace_start"() <{level = 10 : i32, message = "bqk,bkd->bqd"}> : () -> ()
    %cst_30 = arith.constant dense<0.000000e+00> : vector<2x8x8xf32>
    %121 = tpu.matmul %120, %106, %cst_30 {dimension_numbers = #tpu.dot_dimension_numbers<[2], [1], [1], [2], [0, 0, 0, 1, 1, 2], [0], [0]>} : vector<2x8x8xf32>, vector<2x8x8xf32>, vector<2x8x8xf32> -> vector<2x8x8xf32>
    "tpu.trace_stop"() : () -> ()
    %122 = vector.shape_cast %121 : vector<2x8x8xf32> to vector<16x8xf32>
    %123 = vector.extract_strided_slice %31 {offsets = [0, 24], sizes = [16, 8], strides = [1, 1]} : vector<16x32xf32> to vector<16x8xf32>
    %124 = vector.shape_cast %123 : vector<16x8xf32> to vector<2x8x8xf32>
    %125 = vector.extract_strided_slice %36 {offsets = [0, 24], sizes = [16, 8], strides = [1, 1]} : vector<16x32xf32> to vector<16x8xf32>
    %126 = vector.shape_cast %125 : vector<16x8xf32> to vector<2x8x8xf32>
    %127 = vector.extract_strided_slice %37 {offsets = [0, 24], sizes = [16, 8], strides = [1, 1]} : vector<16x32xf32> to vector<16x8xf32>
    %128 = vector.shape_cast %127 : vector<16x8xf32> to vector<2x8x8xf32>
    "tpu.trace_start"() <{level = 10 : i32, message = "bqd,bkd->bqk"}> : () -> ()
    %cst_31 = arith.constant dense<0.000000e+00> : vector<2x8x8xf32>
    %129 = tpu.matmul %124, %126, %cst_31 {dimension_numbers = #tpu.dot_dimension_numbers<[2], [2], [1], [1], [0, 0, 0, 1, 1, 1], [0], [0]>} : vector<2x8x8xf32>, vector<2x8x8xf32>, vector<2x8x8xf32> -> vector<2x8x8xf32>
    "tpu.trace_stop"() : () -> ()
    %130 = vector.shape_cast %25 : vector<8x8xf32> to vector<1x8x8xf32>
    %131 = vector.broadcast %130 : vector<1x8x8xf32> to vector<2x8x8xf32>
    %132 = arith.addf %129, %131 : vector<2x8x8xf32>
    %cst_32 = arith.constant dense<0xFF800000> : vector<2x8xf32>
    %133 = vector.multi_reduction <maximumf>, %132, %cst_32 [2] : vector<2x8x8xf32> to vector<2x8xf32>
    %134 = vector.shape_cast %133 : vector<2x8xf32> to vector<2x8x1xf32>
    %135 = vector.broadcast %134 : vector<2x8x1xf32> to vector<2x8x8xf32>
    %136 = arith.subf %132, %135 : vector<2x8x8xf32>
    %137 = math.exp %136 : vector<2x8x8xf32>
    %cst_33 = arith.constant dense<0.000000e+00> : vector<2x8xf32>
    %138 = vector.multi_reduction <add>, %137, %cst_33 [2] : vector<2x8x8xf32> to vector<2x8xf32>
    %139 = vector.shape_cast %138 : vector<2x8xf32> to vector<2x8x1xf32>
    %140 = tpu.reciprocal %139 {approx = true} : vector<2x8x1xf32> -> vector<2x8x1xf32>
    %141 = vector.broadcast %140 : vector<2x8x1xf32> to vector<2x8x8xf32>
    %142 = arith.mulf %137, %141 : vector<2x8x8xf32>
    "tpu.trace_start"() <{level = 10 : i32, message = "bqk,bkd->bqd"}> : () -> ()
    %cst_34 = arith.constant dense<0.000000e+00> : vector<2x8x8xf32>
    %143 = tpu.matmul %142, %128, %cst_34 {dimension_numbers = #tpu.dot_dimension_numbers<[2], [1], [1], [2], [0, 0, 0, 1, 1, 2], [0], [0]>} : vector<2x8x8xf32>, vector<2x8x8xf32>, vector<2x8x8xf32> -> vector<2x8x8xf32>
    "tpu.trace_stop"() : () -> ()
    %144 = vector.shape_cast %143 : vector<2x8x8xf32> to vector<16x8xf32>
    %145 = tpu.concatenate %78, %100, %122, %144 in 1 : vector<16x8xf32>, vector<16x8xf32>, vector<16x8xf32>, vector<16x8xf32> -> vector<16x32xf32>
    %146 = vector.extract_strided_slice %52 {offsets = [0, 0], sizes = [32, 32], strides = [1, 1]} : vector<160x32xf32> to vector<32x32xf32>
    %cst_35 = arith.constant dense<0.000000e+00> : vector<16x32xf32>
    %147 = tpu.matmul %145, %146, %cst_35 {dimension_numbers = #tpu.dot_dimension_numbers<[1], [0], [0], [1], [0, 0, 1, 1], [], []>} : vector<16x32xf32>, vector<32x32xf32>, vector<16x32xf32> -> vector<16x32xf32>
    %148 = arith.addf %56, %147 : vector<16x32xf32>
    %c0_36 = arith.constant 0 : index
    %c0_37 = arith.constant 0 : index
    %149 = vector.load %arg6[%c0_36, %c0_37] : memref<16x32xf32, #tpu.memory_space<vmem>>, vector<16x32xf32>
    tpu.vector_store %arg6[%c0_36, %c0_37], %148 {strides = array<i32>} : memref<16x32xf32, #tpu.memory_space<vmem>>, vector<16x32xf32>,
    return
  }
  func.func @transform_0(%arg0: i32) -> (i32, i32) {
    %c0_i32 = arith.constant 0 : i32
    %c0_i32_0 = arith.constant 0 : i32
    %c0_i32_1 = arith.constant 0 : i32
    return %c0_i32, %c0_i32_0 : i32, i32
  }
  func.func @transform_1(%arg0: i32) -> (i32, i32) {
    %c0_i32 = arith.constant 0 : i32
    %c0_i32_0 = arith.constant 0 : i32
    %c0_i32_1 = arith.constant 0 : i32
    return %c0_i32, %c0_i32_0 : i32, i32
  }
  func.func @transform_2(%arg0: i32) -> (i32, i32) {
    %c0_i32 = arith.constant 0 : i32
    %c0_i32_0 = arith.constant 0 : i32
    %c0_i32_1 = arith.constant 0 : i32
    return %c0_i32, %c0_i32_0 : i32, i32
  }
  func.func @transform_3(%arg0: i32) -> (i32, i32) {
    %c0_i32 = arith.constant 0 : i32
    %c0_i32_0 = arith.constant 0 : i32
    %c0_i32_1 = arith.constant 0 : i32
    return %c0_i32, %c0_i32_0 : i32, i32
  }
  func.func @transform_4(%arg0: i32) -> (i32, i32) {
    %c0_i32 = arith.constant 0 : i32
    %c0_i32_0 = arith.constant 0 : i32
    %c0_i32_1 = arith.constant 0 : i32
    return %c0_i32, %c0_i32_0 : i32, i32
  }
  func.func @transform_5(%arg0: i32) -> (i32, i32) {
    %c0_i32 = arith.constant 0 : i32
    %c0_i32_0 = arith.constant 0 : i32
    %c0_i32_1 = arith.constant 0 : i32
    return %c0_i32, %c0_i32_0 : i32, i32
  }
}

</mosaic_0001>

<llo_original>
// kernel: tpu_custom_call.1
$region0: #{tpu_custom_call.1}
  #allocation0 [shape = 'u32[]', space=smem, size = 0x4, offset = 0x4, fixed_abs, tag = 'smem constant byte address 0x4 - core index']
  #allocation1 [shape = 'u32[72,128]{1,0:T(1,128)}', space=vmem, size = 0x9000, scoped, tag = 'internal scratch']
  %s0 = inlined_call_operand.vmem [shape: f32[16,32], index: 0, kind: input, shape index: {}]
  %s1 = inlined_call_operand.vmem [shape: f32[32,384], index: 1, kind: input, shape index: {}]
  %s2 = inlined_call_operand.vmem [shape: f32[1,384], index: 2, kind: input, shape index: {}]
  %s3 = inlined_call_operand.vmem [shape: f32[160,32], index: 3, kind: input, shape index: {}]
  %s4 = inlined_call_operand.vmem [shape: f32[16,128], index: 4, kind: input, shape index: {}]
  %s5 = inlined_call_operand.hbm [shape: f32[16,32], index: 5, kind: output, shape index: {}]
  %s6 = sld [smem:[#allocation0]]
  $region30: #{tpu_custom_call.1} parent=0
    _
  %s8 = ssub.s32 1, %s6
  %s9 = scalar_select 0, %s8, %s6
  $region1: #{tpu_custom_call.1} parent=0
    #allocation2 [shape = 'u8[8192]{0}', space=vmem, size = 0x2000, scoped, tag = 'output window, operand 0, single buffered']
    #allocation3 [shape = 's32[1]{0}', space=sflag, size = 0x4, scoped, tag = 'scoped memory for tpu_custom_call.1']
    %10 = vsyncpa [#allocation3], 0
    // Predicated region
    $region2: #{tpu_custom_call.1} parent=1 // pred_check
      _
    $region3: #{tpu_custom_call.1} parent=1 // pred_check_branch
      %12 = sbr.rel (0) target = $region5
    $region4: #{tpu_custom_call.1} parent=1 // pred_region
      _
    $region5: #{tpu_custom_call.1} parent=1 // pred_fallthru
      _
    // Predicated region
    $region6: #{tpu_custom_call.1} parent=1 // pred_check
      _
    $region7: #{tpu_custom_call.1} parent=1 // pred_check_branch
      %14 = sbr.rel (0) target = $region9
    $region8: #{tpu_custom_call.1} parent=1 // pred_region
      _
    $region9: #{tpu_custom_call.1} parent=1 // pred_fallthru
      _
    // Predicated region
    $region10: #{tpu_custom_call.1} parent=1 // pred_check
      _
    $region11: #{tpu_custom_call.1} parent=1 // pred_check_branch
      %16 = sbr.rel (0) target = $region13
    $region12: #{tpu_custom_call.1} parent=1 // pred_region
      _
    $region13: #{tpu_custom_call.1} parent=1 // pred_fallthru
      _
    // Predicated region
    $region14: #{tpu_custom_call.1} parent=1 // pred_check
      _
    $region15: #{tpu_custom_call.1} parent=1 // pred_check_branch
      %18 = sbr.rel (0) target = $region17
    $region16: #{tpu_custom_call.1} parent=1 // pred_region
      _
    $region17: #{tpu_custom_call.1} parent=1 // pred_fallthru
      _
    // Predicated region
    $region18: #{tpu_custom_call.1} parent=1 // pred_check
      _
    $region19: #{tpu_custom_call.1} parent=1 // pred_check_branch
      %20 = sbr.rel (0) target = $region21
    $region20: #{tpu_custom_call.1} parent=1 // pred_region
      _
    $region21: #{tpu_custom_call.1} parent=1 // pred_fallthru
      _
    %v21 = vld [vmem:[%s0] sm:$0xff]
    %v22 = vld [vmem:[%s0 + $0x8] sm:$0xff]
    %vm23 = vcmask 261120
    %v24 = vsel %vm23, %v21, 0.0
    %25 = vadd.xlane.f32.xlu0 %v24
    %v26 = vpop.xlane.xlu0 %25
    %v27 = vsel %vm23, %v22, 0.0
    %28 = vadd.xlane.f32.xlu0 %v27
    %v29 = vpop.xlane.xlu0 %28
    %v30 = vrcp.pop 32.0
    %v31 = vmul.f32 32.0, %v30
    %v32 = vsub.f32 1.0, %v31
    %v33 = vmul.f32 %v30, %v32
    %v34 = vadd.f32 %v30, %v33
    %vm35 = vweird.f32 %v30
    %v36 = vsel %vm35, %v30, %v34
    %v37 = vmul.f32 %v26, %v36
    %v38 = vmul.f32 %v29, %v36
    %v39 = vsub.f32 %v21, %v37
    %v40 = vsub.f32 %v22, %v38
    %v41 = vmul.f32 %v39, %v39
    %v42 = vmul.f32 %v40, %v40
    %v43 = vsel %vm23, %v41, 0.0
    %44 = vadd.xlane.f32.xlu0 %v43
    %v45 = vpop.xlane.xlu0 %44
    %v46 = vsel %vm23, %v42, 0.0
    %47 = vadd.xlane.f32.xlu0 %v46
    %v48 = vpop.xlane.xlu0 %47
    %v49 = vmul.f32 %v45, %v36
    %v50 = vmul.f32 %v48, %v36
    %v51 = vadd.f32 %v49, 1e-05
    %v52 = vadd.f32 %v50, 1e-05
    %v53 = vrsqrt.pop %v51
    %v54 = vmul.f32 %v53, %v51
    %v55 = vmul.f32 %v54, %v53
    %v56 = vmul.f32 0.5, %v55
    %v57 = vsub.f32 1.5, %v56
    %v58 = vmul.f32 %v53, %v57
    %vm59 = vweird.f32 %v51
    %vm60 = vweird.f32 %v53
    %vm61 = vmor %vm59, %vm60
    %v62 = vsel %vm61, %v53, %v58
    %v63 = vrsqrt.pop %v52
    %v64 = vmul.f32 %v63, %v52
    %v65 = vmul.f32 %v64, %v63
    %v66 = vmul.f32 0.5, %v65
    %v67 = vsub.f32 1.5, %v66
    %v68 = vmul.f32 %v63, %v67
    %vm69 = vweird.f32 %v52
    %vm70 = vweird.f32 %v63
    %vm71 = vmor %vm69, %vm70
    %v72 = vsel %vm71, %v63, %v68
    %v73 = vmul.f32 %v39, %v62
    %v74 = vmul.f32 %v40, %v72
    %v75 = vld [vmem:[%s1] sm:$0xff]
    %v76 = vld [vmem:[%s1 + $0x8] sm:$0xff]
    %v77 = vld [vmem:[%s1 + $0x10] sm:$0xff]
    %v78 = vld [vmem:[%s1 + $0x18] sm:$0xff]
    %v79 = vld [vmem:[%s1 + $0x20] sm:$0xff]
    %v80 = vld [vmem:[%s1 + $0x28] sm:$0xff]
    %v81 = vld [vmem:[%s1 + $0x30] sm:$0xff]
    %v82 = vld [vmem:[%s1 + $0x38] sm:$0xff]
    %v83 = vld [vmem:[%s1 + $0x40] sm:$0xff]
    %v84 = vld [vmem:[%s1 + $0x48] sm:$0xff]
    %v85 = vld [vmem:[%s1 + $0x50] sm:$0xff]
    %v86 = vld [vmem:[%s1 + $0x58] sm:$0xff]
    %v87 = vld [vmem:[%s2] sm:$0x7]
    %v89 = vperm.slane %v87, 0
    %v90 = vperm.slane %v87, 1
    %v91 = vperm.slane %v87, 2
    %v96 = vsel %vm23, %v73, 0
    %v99 = vsel %vm23, %v74, 0
    %101 = vmatpush.msra.mxu0 0.0
    %102 = vmatpush.msra.mxu0 0.0
    %103 = vmatpush.msra.mxu0 0.0
    %104 = vmatpush.msra.mxu0 0.0
    %105 = vmatpush.msra.mxu0 0.0
    %106 = vmatpush.msra.mxu0 0.0
    %107 = vmatpush.msra.mxu0 0.0
    %108 = vmatpush.msra.mxu0 0.0
    %109 = vmatpush.msra.mxu0 0.0
    %110 = vmatpush.msra.mxu0 0.0
    %111 = vmatpush.msra.mxu0 0.0
    %112 = vmatpush.msra.mxu0 0.0
    %113 = vmatpush.msra.mxu0 %v84
    %114 = vmatpush.msra.mxu0 %v81
    %115 = vmatpush.msra.mxu0 %v78
    %116 = vmatpush.msra.mxu0 %v75
    %117 = vmatmul.f32.gmra.mxu0 %v96
    %v118 = vpop.f32.mrf.mxu0
    %v119 = vadd.f32 %v89, %v118
    %120 = vmatmul.f32.gmra.mxu0 %v99
    %v121 = vpop.f32.mrf.mxu0
    %v122 = vadd.f32 %v89, %v121
    %123 = vdwg.mxu0
    %124 = vmatpush.msra.mxu0 0.0
    %125 = vmatpush.msra.mxu0 0.0
    %126 = vmatpush.msra.mxu0 0.0
    %127 = vmatpush.msra.mxu0 0.0
    %128 = vmatpush.msra.mxu0 0.0
    %129 = vmatpush.msra.mxu0 0.0
    %130 = vmatpush.msra.mxu0 0.0
    %131 = vmatpush.msra.mxu0 0.0
    %132 = vmatpush.msra.mxu0 0.0
    %133 = vmatpush.msra.mxu0 0.0
    %134 = vmatpush.msra.mxu0 0.0
    %135 = vmatpush.msra.mxu0 0.0
    %136 = vmatpush.msra.mxu0 %v85
    %137 = vmatpush.msra.mxu0 %v82
    %138 = vmatpush.msra.mxu0 %v79
    %139 = vmatpush.msra.mxu0 %v76
    %140 = vmatmul.f32.gmra.mxu0 %v96
    %v141 = vpop.f32.mrf.mxu0
    %v142 = vadd.f32 %v90, %v141
    %143 = vmatmul.f32.gmra.mxu0 %v99
    %v144 = vpop.f32.mrf.mxu0
    %v145 = vadd.f32 %v90, %v144
    %146 = vdwg.mxu0
    %147 = vmatpush.msra.mxu0 0.0
    %148 = vmatpush.msra.mxu0 0.0
    %149 = vmatpush.msra.mxu0 0.0
    %150 = vmatpush.msra.mxu0 0.0
    %151 = vmatpush.msra.mxu0 0.0
    %152 = vmatpush.msra.mxu0 0.0
    %153 = vmatpush.msra.mxu0 0.0
    %154 = vmatpush.msra.mxu0 0.0
    %155 = vmatpush.msra.mxu0 0.0
    %156 = vmatpush.msra.mxu0 0.0
    %157 = vmatpush.msra.mxu0 0.0
    %158 = vmatpush.msra.mxu0 0.0
    %159 = vmatpush.msra.mxu0 %v86
    %160 = vmatpush.msra.mxu0 %v83
    %161 = vmatpush.msra.mxu0 %v80
    %162 = vmatpush.msra.mxu0 %v77
    %163 = vmatmul.f32.gmra.mxu0 %v96
    %v164 = vpop.f32.mrf.mxu0
    %v165 = vadd.f32 %v91, %v164
    %166 = vmatmul.f32.gmra.mxu0 %v99
    %v167 = vpop.f32.mrf.mxu0
    %v168 = vadd.f32 %v91, %v167
    %169 = vdwg.mxu0
    %v170 = vld [vmem:[%s4] sm:$0xff]
    %v171 = vld [vmem:[%s4 + $0x8] sm:$0xff]
    %v172 = vmul.f32 %v119, %v170
    %v173 = vmul.f32 %v122, %v171
    %176 = vrot.lane.b32.xlu0 %v172, 96
    %v177 = vpop.permute.xlu0 %176
    %178 = vrot.lane.b32.xlu0 %v173, 96
    %v179 = vpop.permute.xlu0 %178
    %v182 = vadd.f32 %v172, %v177
    %v183 = vadd.f32 %v173, %v179
    %186 = vrot.lane.b32.xlu0 %v170, 64
    %v187 = vpop.permute.xlu0 %186
    %188 = vrot.lane.b32.xlu0 %v171, 64
    %v189 = vpop.permute.xlu0 %188
    %v192 = vmul.f32 %v119, %v187
    %v193 = vmul.f32 %v122, %v189
    %196 = vrot.lane.b32.xlu0 %v192, 96
    %v197 = vpop.permute.xlu0 %196
    %198 = vrot.lane.b32.xlu0 %v193, 96
    %v199 = vpop.permute.xlu0 %198
    %v202 = vadd.f32 %v192, %v197
    %v203 = vadd.f32 %v193, %v199
    %v204 = vmul.f32 %v165, 0.5
    %v205 = vmul.f32 %v168, 0.5
    %v206 = vmul.f32 %v165, 0.044715
    %v207 = vmul.f32 %v168, 0.044715
    %v208 = vmul.f32 %v206, %v165
    %v209 = vmul.f32 %v207, %v168
    %v210 = vmul.f32 %v208, %v165
    %v211 = vmul.f32 %v209, %v168
    %v212 = vadd.f32 %v165, %v210
    %v213 = vadd.f32 %v168, %v211
    %v214 = vmul.f32 %v212, 0.7978846
    %v215 = vmul.f32 %v213, 0.7978846
    %v216 = vtanh.pop %v214
    %v217 = vtanh.pop %v215
    %v218 = vadd.f32 %v216, 1.0
    %v219 = vadd.f32 %v217, 1.0
    %v220 = vmul.f32 %v204, %v218
    %v221 = vmul.f32 %v205, %v219
    %v222 = vld [vmem:[%s3] sm:$0xff]
    %v223 = vld [vmem:[%s3 + $0x8] sm:$0xff]
    %v224 = vld [vmem:[%s3 + $0x10] sm:$0xff]
    %v225 = vld [vmem:[%s3 + $0x18] sm:$0xff]
    %v226 = vld [vmem:[%s3 + $0x20] sm:$0xff]
    %v227 = vld [vmem:[%s3 + $0x28] sm:$0xff]
    %v228 = vld [vmem:[%s3 + $0x30] sm:$0xff]
    %v229 = vld [vmem:[%s3 + $0x38] sm:$0xff]
    %v230 = vld [vmem:[%s3 + $0x40] sm:$0xff]
    %v231 = vld [vmem:[%s3 + $0x48] sm:$0xff]
    %v232 = vld [vmem:[%s3 + $0x50] sm:$0xff]
    %v233 = vld [vmem:[%s3 + $0x58] sm:$0xff]
    %v234 = vld [vmem:[%s3 + $0x60] sm:$0xff]
    %v235 = vld [vmem:[%s3 + $0x68] sm:$0xff]
    %v236 = vld [vmem:[%s3 + $0x70] sm:$0xff]
    %v237 = vld [vmem:[%s3 + $0x78] sm:$0xff]
    %v238 = vld [vmem:[%s3 + $0x80] sm:$0xff]
    %v239 = vld [vmem:[%s3 + $0x88] sm:$0xff]
    %v240 = vld [vmem:[%s3 + $0x90] sm:$0xff]
    %v241 = vld [vmem:[%s3 + $0x98] sm:$0xff]
    %242 = vrot.lane.b32.xlu0 %v170, 56
    %v243 = vpop.permute.xlu0 %242
    %244 = vrot.lane.b32.xlu0 %v171, 56
    %v245 = vpop.permute.xlu0 %244
    %v248 = vadd.f32 %v21, %v243
    %v249 = vadd.f32 %v22, %v245
    %250 = vmatpush.msra.mxu0 %v241
    %251 = vmatpush.msra.mxu0 %v240
    %252 = vmatpush.msra.mxu0 %v239
    %253 = vmatpush.msra.mxu0 %v238
    %254 = vmatpush.msra.mxu0 %v237
    %255 = vmatpush.msra.mxu0 %v236
    %256 = vmatpush.msra.mxu0 %v235
    %257 = vmatpush.msra.mxu0 %v234
    %258 = vmatpush.msra.mxu0 %v233
    %259 = vmatpush.msra.mxu0 %v232
    %260 = vmatpush.msra.mxu0 %v231
    %261 = vmatpush.msra.mxu0 %v230
    %262 = vmatpush.msra.mxu0 %v229
    %263 = vmatpush.msra.mxu0 %v228
    %264 = vmatpush.msra.mxu0 %v227
    %265 = vmatpush.msra.mxu0 %v226
    %266 = vmatmul.f32.gmra.mxu0 %v220
    %v267 = vpop.f32.mrf.mxu0
    %v268 = vadd.f32 0.0, %v267
    %269 = vmatmul.f32.gmra.mxu0 %v221
    %v270 = vpop.f32.mrf.mxu0
    %v271 = vadd.f32 0.0, %v270
    %272 = vdwg.mxu0
    %v273 = vadd.f32 %v248, %v268
    %v274 = vadd.f32 %v249, %v271
    %276 = vrot.lane.b32.xlu0 %v202, 64
    %v277 = vpop.permute.xlu0 %276
    %vm278 = vcmask 64512
    %v280 = vsel %vm278, %v182, 0
    %v282 = vsel %vm278, %v277, 0
    %284 = vmatpush.xpose.msra.mxu0 0.0
    %285 = vmatpush.xpose.msra.mxu0 0.0
    %286 = vmatpush.xpose.msra.mxu0 0.0
    %287 = vmatpush.xpose.msra.mxu0 0.0
    %288 = vmatpush.xpose.msra.mxu0 0.0
    %289 = vmatpush.xpose.msra.mxu0 0.0
    %290 = vmatpush.xpose.msra.mxu0 0.0
    %291 = vmatpush.xpose.msra.mxu0 0.0
    %292 = vmatpush.xpose.msra.mxu0 0.0
    %293 = vmatpush.xpose.msra.mxu0 0.0
    %294 = vmatpush.xpose.msra.mxu0 0.0
    %295 = vmatpush.xpose.msra.mxu0 0.0
    %296 = vmatpush.xpose.msra.mxu0 0.0
    %297 = vmatpush.xpose.msra.mxu0 0.0
    %298 = vmatpush.xpose.msra.mxu0 0.0
    %299 = vmatpush.xpose.msra.mxu0 %v282
    %300 = vmatmul.f32.gmra.mxu0 %v280
    %v301 = vpop.f32.mrf.mxu0
    %v302 = vadd.f32 %v187, %v301
    %303 = vdwg.mxu0
    %305 = vrot.lane.b32.xlu0 %v203, 64
    %v306 = vpop.permute.xlu0 %305
    %v308 = vsel %vm278, %v183, 0
    %v310 = vsel %vm278, %v306, 0
    %312 = vmatpush.xpose.msra.mxu0 0.0
    %313 = vmatpush.xpose.msra.mxu0 0.0
    %314 = vmatpush.xpose.msra.mxu0 0.0
    %315 = vmatpush.xpose.msra.mxu0 0.0
    %316 = vmatpush.xpose.msra.mxu0 0.0
    %317 = vmatpush.xpose.msra.mxu0 0.0
    %318 = vmatpush.xpose.msra.mxu0 0.0
    %319 = vmatpush.xpose.msra.mxu0 0.0
    %320 = vmatpush.xpose.msra.mxu0 0.0
    %321 = vmatpush.xpose.msra.mxu0 0.0
    %322 = vmatpush.xpose.msra.mxu0 0.0
    %323 = vmatpush.xpose.msra.mxu0 0.0
    %324 = vmatpush.xpose.msra.mxu0 0.0
    %325 = vmatpush.xpose.msra.mxu0 0.0
    %326 = vmatpush.xpose.msra.mxu0 0.0
    %327 = vmatpush.xpose.msra.mxu0 %v310
    %328 = vmatmul.f32.gmra.mxu0 %v308
    %v329 = vpop.f32.mrf.mxu0
    %v330 = vadd.f32 %v187, %v329
    %331 = vdwg.mxu0
    %v332 = vsel %vm278, %v302, -inf
    %333 = vmax.xlane.f32.xlu0 %v332
    %v334 = vpop.xlane.xlu0 %333
    %v335 = vsel %vm278, %v330, -inf
    %336 = vmax.xlane.f32.xlu0 %v335
    %v337 = vpop.xlane.xlu0 %336
    %v338 = vsub.f32 %v302, %v334
    %v339 = vsub.f32 %v330, %v337
    %v340 = vmul.f32 %v338, 1.442695
    %v341 = vpow.pop %v340
    %v342 = vmul.f32 %v339, 1.442695
    %v343 = vpow.pop %v342
    %v344 = vsel %vm278, %v341, 0.0
    %345 = vadd.xlane.f32.xlu0 %v344
    %v346 = vpop.xlane.xlu0 %345
    %v347 = vsel %vm278, %v343, 0.0
    %348 = vadd.xlane.f32.xlu0 %v347
    %v349 = vpop.xlane.xlu0 %348
    %v350 = vrcp.pop %v346
    %v351 = vrcp.pop %v349
    %v352 = vmul.f32 %v341, %v350
    %v353 = vmul.f32 %v343, %v351
    %v355 = vsel %vm278, %v352, 0
    %357 = vmatpush.msra.mxu0 0.0
    %358 = vmatpush.msra.mxu0 0.0
    %359 = vmatpush.msra.mxu0 0.0
    %360 = vmatpush.msra.mxu0 0.0
    %361 = vmatpush.msra.mxu0 0.0
    %362 = vmatpush.msra.mxu0 0.0
    %363 = vmatpush.msra.mxu0 0.0
    %364 = vmatpush.msra.mxu0 0.0
    %365 = vmatpush.msra.mxu0 0.0
    %366 = vmatpush.msra.mxu0 0.0
    %367 = vmatpush.msra.mxu0 0.0
    %368 = vmatpush.msra.mxu0 0.0
    %369 = vmatpush.msra.mxu0 0.0
    %370 = vmatpush.msra.mxu0 0.0
    %371 = vmatpush.msra.mxu0 0.0
    %372 = vmatpush.msra.mxu0 %v142
    %373 = vmatmul.f32.gmra.mxu0 %v355
    %v374 = vpop.f32.mrf.mxu0
    %v375 = vadd.f32 0.0, %v374
    %376 = vdwg.mxu0
    %v378 = vsel %vm278, %v353, 0
    %380 = vmatpush.msra.mxu0 0.0
    %381 = vmatpush.msra.mxu0 0.0
    %382 = vmatpush.msra.mxu0 0.0
    %383 = vmatpush.msra.mxu0 0.0
    %384 = vmatpush.msra.mxu0 0.0
    %385 = vmatpush.msra.mxu0 0.0
    %386 = vmatpush.msra.mxu0 0.0
    %387 = vmatpush.msra.mxu0 0.0
    %388 = vmatpush.msra.mxu0 0.0
    %389 = vmatpush.msra.mxu0 0.0
    %390 = vmatpush.msra.mxu0 0.0
    %391 = vmatpush.msra.mxu0 0.0
    %392 = vmatpush.msra.mxu0 0.0
    %393 = vmatpush.msra.mxu0 0.0
    %394 = vmatpush.msra.mxu0 0.0
    %395 = vmatpush.msra.mxu0 %v145
    %396 = vmatmul.f32.gmra.mxu0 %v378
    %v397 = vpop.f32.mrf.mxu0
    %v398 = vadd.f32 0.0, %v397
    %399 = vdwg.mxu0
    %400 = vrot.lane.b32.xlu0 %v182, 120
    %v401 = vpop.permute.xlu0 %400
    %402 = vrot.lane.b32.xlu0 %v202, 56
    %v403 = vpop.permute.xlu0 %402
    %v404 = vsel %vm278, %v401, 0
    %v406 = vsel %vm278, %v403, 0
    %408 = vmatpush.xpose.msra.mxu0 0.0
    %409 = vmatpush.xpose.msra.mxu0 0.0
    %410 = vmatpush.xpose.msra.mxu0 0.0
    %411 = vmatpush.xpose.msra.mxu0 0.0
    %412 = vmatpush.xpose.msra.mxu0 0.0
    %413 = vmatpush.xpose.msra.mxu0 0.0
    %414 = vmatpush.xpose.msra.mxu0 0.0
    %415 = vmatpush.xpose.msra.mxu0 0.0
    %416 = vmatpush.xpose.msra.mxu0 0.0
    %417 = vmatpush.xpose.msra.mxu0 0.0
    %418 = vmatpush.xpose.msra.mxu0 0.0
    %419 = vmatpush.xpose.msra.mxu0 0.0
    %420 = vmatpush.xpose.msra.mxu0 0.0
    %421 = vmatpush.xpose.msra.mxu0 0.0
    %422 = vmatpush.xpose.msra.mxu0 0.0
    %423 = vmatpush.xpose.msra.mxu0 %v406
    %424 = vmatmul.f32.gmra.mxu0 %v404
    %v425 = vpop.f32.mrf.mxu0
    %v426 = vadd.f32 %v187, %v425
    %427 = vdwg.mxu0
    %428 = vrot.lane.b32.xlu0 %v183, 120
    %v429 = vpop.permute.xlu0 %428
    %430 = vrot.lane.b32.xlu0 %v203, 56
    %v431 = vpop.permute.xlu0 %430
    %v432 = vsel %vm278, %v429, 0
    %v434 = vsel %vm278, %v431, 0
    %436 = vmatpush.xpose.msra.mxu0 0.0
    %437 = vmatpush.xpose.msra.mxu0 0.0
    %438 = vmatpush.xpose.msra.mxu0 0.0
    %439 = vmatpush.xpose.msra.mxu0 0.0
    %440 = vmatpush.xpose.msra.mxu0 0.0
    %441 = vmatpush.xpose.msra.mxu0 0.0
    %442 = vmatpush.xpose.msra.mxu0 0.0
    %443 = vmatpush.xpose.msra.mxu0 0.0
    %444 = vmatpush.xpose.msra.mxu0 0.0
    %445 = vmatpush.xpose.msra.mxu0 0.0
    %446 = vmatpush.xpose.msra.mxu0 0.0
    %447 = vmatpush.xpose.msra.mxu0 0.0
    %448 = vmatpush.xpose.msra.mxu0 0.0
    %449 = vmatpush.xpose.msra.mxu0 0.0
    %450 = vmatpush.xpose.msra.mxu0 0.0
    %451 = vmatpush.xpose.msra.mxu0 %v434
    %452 = vmatmul.f32.gmra.mxu0 %v432
    %v453 = vpop.f32.mrf.mxu0
    %v454 = vadd.f32 %v187, %v453
    %455 = vdwg.mxu0
    %v456 = vsel %vm278, %v426, -inf
    %457 = vmax.xlane.f32.xlu0 %v456
    %v458 = vpop.xlane.xlu0 %457
    %v459 = vsel %vm278, %v454, -inf
    %460 = vmax.xlane.f32.xlu0 %v459
    %v461 = vpop.xlane.xlu0 %460
    %v462 = vsub.f32 %v426, %v458
    %v463 = vsub.f32 %v454, %v461
    %v464 = vmul.f32 %v462, 1.442695
    %v465 = vpow.pop %v464
    %v466 = vmul.f32 %v463, 1.442695
    %v467 = vpow.pop %v466
    %v468 = vsel %vm278, %v465, 0.0
    %469 = vadd.xlane.f32.xlu0 %v468
    %v470 = vpop.xlane.xlu0 %469
    %v471 = vsel %vm278, %v467, 0.0
    %472 = vadd.xlane.f32.xlu0 %v471
    %v473 = vpop.xlane.xlu0 %472
    %v474 = vrcp.pop %v470
    %v475 = vrcp.pop %v473
    %v476 = vmul.f32 %v465, %v474
    %v477 = vmul.f32 %v467, %v475
    %479 = vrot.lane.b32.xlu0 %v142, 120
    %v480 = vpop.permute.xlu0 %479
    %v483 = vsel %vm278, %v476, 0
    %485 = vmatpush.msra.mxu0 0.0
    %486 = vmatpush.msra.mxu0 0.0
    %487 = vmatpush.msra.mxu0 0.0
    %488 = vmatpush.msra.mxu0 0.0
    %489 = vmatpush.msra.mxu0 0.0
    %490 = vmatpush.msra.mxu0 0.0
    %491 = vmatpush.msra.mxu0 0.0
    %492 = vmatpush.msra.mxu0 0.0
    %493 = vmatpush.msra.mxu0 0.0
    %494 = vmatpush.msra.mxu0 0.0
    %495 = vmatpush.msra.mxu0 0.0
    %496 = vmatpush.msra.mxu0 0.0
    %497 = vmatpush.msra.mxu0 0.0
    %498 = vmatpush.msra.mxu0 0.0
    %499 = vmatpush.msra.mxu0 0.0
    %500 = vmatpush.msra.mxu0 %v480
    %501 = vmatmul.f32.gmra.mxu0 %v483
    %v502 = vpop.f32.mrf.mxu0
    %v503 = vadd.f32 0.0, %v502
    %504 = vdwg.mxu0
    %506 = vrot.lane.b32.xlu0 %v145, 120
    %v507 = vpop.permute.xlu0 %506
    %v510 = vsel %vm278, %v477, 0
    %512 = vmatpush.msra.mxu0 0.0
    %513 = vmatpush.msra.mxu0 0.0
    %514 = vmatpush.msra.mxu0 0.0
    %515 = vmatpush.msra.mxu0 0.0
    %516 = vmatpush.msra.mxu0 0.0
    %517 = vmatpush.msra.mxu0 0.0
    %518 = vmatpush.msra.mxu0 0.0
    %519 = vmatpush.msra.mxu0 0.0
    %520 = vmatpush.msra.mxu0 0.0
    %521 = vmatpush.msra.mxu0 0.0
    %522 = vmatpush.msra.mxu0 0.0
    %523 = vmatpush.msra.mxu0 0.0
    %524 = vmatpush.msra.mxu0 0.0
    %525 = vmatpush.msra.mxu0 0.0
    %526 = vmatpush.msra.mxu0 0.0
    %527 = vmatpush.msra.mxu0 %v507
    %528 = vmatmul.f32.gmra.mxu0 %v510
    %v529 = vpop.f32.mrf.mxu0
    %v530 = vadd.f32 0.0, %v529
    %531 = vdwg.mxu0
    %532 = vrot.lane.b32.xlu0 %v182, 112
    %v533 = vpop.permute.xlu0 %532
    %534 = vrot.lane.b32.xlu0 %v202, 48
    %v535 = vpop.permute.xlu0 %534
    %v536 = vsel %vm278, %v533, 0
    %v538 = vsel %vm278, %v535, 0
    %540 = vmatpush.xpose.msra.mxu0 0.0
    %541 = vmatpush.xpose.msra.mxu0 0.0
    %542 = vmatpush.xpose.msra.mxu0 0.0
    %543 = vmatpush.xpose.msra.mxu0 0.0
    %544 = vmatpush.xpose.msra.mxu0 0.0
    %545 = vmatpush.xpose.msra.mxu0 0.0
    %546 = vmatpush.xpose.msra.mxu0 0.0
    %547 = vmatpush.xpose.msra.mxu0 0.0
    %548 = vmatpush.xpose.msra.mxu0 0.0
    %549 = vmatpush.xpose.msra.mxu0 0.0
    %550 = vmatpush.xpose.msra.mxu0 0.0
    %551 = vmatpush.xpose.msra.mxu0 0.0
    %552 = vmatpush.xpose.msra.mxu0 0.0
    %553 = vmatpush.xpose.msra.mxu0 0.0
    %554 = vmatpush.xpose.msra.mxu0 0.0
    %555 = vmatpush.xpose.msra.mxu0 %v538
    %556 = vmatmul.f32.gmra.mxu0 %v536
    %v557 = vpop.f32.mrf.mxu0
    %v558 = vadd.f32 %v187, %v557
    %559 = vdwg.mxu0
    %560 = vrot.lane.b32.xlu0 %v183, 112
    %v561 = vpop.permute.xlu0 %560
    %562 = vrot.lane.b32.xlu0 %v203, 48
    %v563 = vpop.permute.xlu0 %562
    %v564 = vsel %vm278, %v561, 0
    %v566 = vsel %vm278, %v563, 0
    %568 = vmatpush.xpose.msra.mxu0 0.0
    %569 = vmatpush.xpose.msra.mxu0 0.0
    %570 = vmatpush.xpose.msra.mxu0 0.0
    %571 = vmatpush.xpose.msra.mxu0 0.0
    %572 = vmatpush.xpose.msra.mxu0 0.0
    %573 = vmatpush.xpose.msra.mxu0 0.0
    %574 = vmatpush.xpose.msra.mxu0 0.0
    %575 = vmatpush.xpose.msra.mxu0 0.0
    %576 = vmatpush.xpose.msra.mxu0 0.0
    %577 = vmatpush.xpose.msra.mxu0 0.0
    %578 = vmatpush.xpose.msra.mxu0 0.0
    %579 = vmatpush.xpose.msra.mxu0 0.0
    %580 = vmatpush.xpose.msra.mxu0 0.0
    %581 = vmatpush.xpose.msra.mxu0 0.0
    %582 = vmatpush.xpose.msra.mxu0 0.0
    %583 = vmatpush.xpose.msra.mxu0 %v566
    %584 = vmatmul.f32.gmra.mxu0 %v564
    %v585 = vpop.f32.mrf.mxu0
    %v586 = vadd.f32 %v187, %v585
    %587 = vdwg.mxu0
    %v588 = vsel %vm278, %v558, -inf
    %589 = vmax.xlane.f32.xlu0 %v588
    %v590 = vpop.xlane.xlu0 %589
    %v591 = vsel %vm278, %v586, -inf
    %592 = vmax.xlane.f32.xlu0 %v591
    %v593 = vpop.xlane.xlu0 %592
    %v594 = vsub.f32 %v558, %v590
    %v595 = vsub.f32 %v586, %v593
    %v596 = vmul.f32 %v594, 1.442695
    %v597 = vpow.pop %v596
    %v598 = vmul.f32 %v595, 1.442695
    %v599 = vpow.pop %v598
    %v600 = vsel %vm278, %v597, 0.0
    %601 = vadd.xlane.f32.xlu0 %v600
    %v602 = vpop.xlane.xlu0 %601
    %v603 = vsel %vm278, %v599, 0.0
    %604 = vadd.xlane.f32.xlu0 %v603
    %v605 = vpop.xlane.xlu0 %604
    %v606 = vrcp.pop %v602
    %v607 = vrcp.pop %v605
    %v608 = vmul.f32 %v597, %v606
    %v609 = vmul.f32 %v599, %v607
    %610 = vrot.lane.b32.xlu0 %v142, 112
    %v611 = vpop.permute.xlu0 %610
    %v614 = vsel %vm278, %v608, 0
    %616 = vmatpush.msra.mxu0 0.0
    %617 = vmatpush.msra.mxu0 0.0
    %618 = vmatpush.msra.mxu0 0.0
    %619 = vmatpush.msra.mxu0 0.0
    %620 = vmatpush.msra.mxu0 0.0
    %621 = vmatpush.msra.mxu0 0.0
    %622 = vmatpush.msra.mxu0 0.0
    %623 = vmatpush.msra.mxu0 0.0
    %624 = vmatpush.msra.mxu0 0.0
    %625 = vmatpush.msra.mxu0 0.0
    %626 = vmatpush.msra.mxu0 0.0
    %627 = vmatpush.msra.mxu0 0.0
    %628 = vmatpush.msra.mxu0 0.0
    %629 = vmatpush.msra.mxu0 0.0
    %630 = vmatpush.msra.mxu0 0.0
    %631 = vmatpush.msra.mxu0 %v611
    %632 = vmatmul.f32.gmra.mxu0 %v614
    %v633 = vpop.f32.mrf.mxu0
    %v634 = vadd.f32 0.0, %v633
    %635 = vdwg.mxu0
    %636 = vrot.lane.b32.xlu0 %v145, 112
    %v637 = vpop.permute.xlu0 %636
    %v640 = vsel %vm278, %v609, 0
    %642 = vmatpush.msra.mxu0 0.0
    %643 = vmatpush.msra.mxu0 0.0
    %644 = vmatpush.msra.mxu0 0.0
    %645 = vmatpush.msra.mxu0 0.0
    %646 = vmatpush.msra.mxu0 0.0
    %647 = vmatpush.msra.mxu0 0.0
    %648 = vmatpush.msra.mxu0 0.0
    %649 = vmatpush.msra.mxu0 0.0
    %650 = vmatpush.msra.mxu0 0.0
    %651 = vmatpush.msra.mxu0 0.0
    %652 = vmatpush.msra.mxu0 0.0
    %653 = vmatpush.msra.mxu0 0.0
    %654 = vmatpush.msra.mxu0 0.0
    %655 = vmatpush.msra.mxu0 0.0
    %656 = vmatpush.msra.mxu0 0.0
    %657 = vmatpush.msra.mxu0 %v637
    %658 = vmatmul.f32.gmra.mxu0 %v640
    %v659 = vpop.f32.mrf.mxu0
    %v660 = vadd.f32 0.0, %v659
    %661 = vdwg.mxu0
    %662 = vrot.lane.b32.xlu0 %v182, 104
    %v663 = vpop.permute.xlu0 %662
    %664 = vrot.lane.b32.xlu0 %v202, 40
    %v665 = vpop.permute.xlu0 %664
    %v666 = vsel %vm278, %v663, 0
    %v668 = vsel %vm278, %v665, 0
    %670 = vmatpush.xpose.msra.mxu0 0.0
    %671 = vmatpush.xpose.msra.mxu0 0.0
    %672 = vmatpush.xpose.msra.mxu0 0.0
    %673 = vmatpush.xpose.msra.mxu0 0.0
    %674 = vmatpush.xpose.msra.mxu0 0.0
    %675 = vmatpush.xpose.msra.mxu0 0.0
    %676 = vmatpush.xpose.msra.mxu0 0.0
    %677 = vmatpush.xpose.msra.mxu0 0.0
    %678 = vmatpush.xpose.msra.mxu0 0.0
    %679 = vmatpush.xpose.msra.mxu0 0.0
    %680 = vmatpush.xpose.msra.mxu0 0.0
    %681 = vmatpush.xpose.msra.mxu0 0.0
    %682 = vmatpush.xpose.msra.mxu0 0.0
    %683 = vmatpush.xpose.msra.mxu0 0.0
    %684 = vmatpush.xpose.msra.mxu0 0.0
    %685 = vmatpush.xpose.msra.mxu0 %v668
    %686 = vmatmul.f32.gmra.mxu0 %v666
    %v687 = vpop.f32.mrf.mxu0
    %v688 = vadd.f32 %v187, %v687
    %689 = vdwg.mxu0
    %690 = vrot.lane.b32.xlu0 %v183, 104
    %v691 = vpop.permute.xlu0 %690
    %692 = vrot.lane.b32.xlu0 %v203, 40
    %v693 = vpop.permute.xlu0 %692
    %v694 = vsel %vm278, %v691, 0
    %v696 = vsel %vm278, %v693, 0
    %698 = vmatpush.xpose.msra.mxu0 0.0
    %699 = vmatpush.xpose.msra.mxu0 0.0
    %700 = vmatpush.xpose.msra.mxu0 0.0
    %701 = vmatpush.xpose.msra.mxu0 0.0
    %702 = vmatpush.xpose.msra.mxu0 0.0
    %703 = vmatpush.xpose.msra.mxu0 0.0
    %704 = vmatpush.xpose.msra.mxu0 0.0
    %705 = vmatpush.xpose.msra.mxu0 0.0
    %706 = vmatpush.xpose.msra.mxu0 0.0
    %707 = vmatpush.xpose.msra.mxu0 0.0
    %708 = vmatpush.xpose.msra.mxu0 0.0
    %709 = vmatpush.xpose.msra.mxu0 0.0
    %710 = vmatpush.xpose.msra.mxu0 0.0
    %711 = vmatpush.xpose.msra.mxu0 0.0
    %712 = vmatpush.xpose.msra.mxu0 0.0
    %713 = vmatpush.xpose.msra.mxu0 %v696
    %714 = vmatmul.f32.gmra.mxu0 %v694
    %v715 = vpop.f32.mrf.mxu0
    %v716 = vadd.f32 %v187, %v715
    %717 = vdwg.mxu0
    %v718 = vsel %vm278, %v688, -inf
    %719 = vmax.xlane.f32.xlu0 %v718
    %v720 = vpop.xlane.xlu0 %719
    %v721 = vsel %vm278, %v716, -inf
    %722 = vmax.xlane.f32.xlu0 %v721
    %v723 = vpop.xlane.xlu0 %722
    %v724 = vsub.f32 %v688, %v720
    %v725 = vsub.f32 %v716, %v723
    %v726 = vmul.f32 %v724, 1.442695
    %v727 = vpow.pop %v726
    %v728 = vmul.f32 %v725, 1.442695
    %v729 = vpow.pop %v728
    %v730 = vsel %vm278, %v727, 0.0
    %731 = vadd.xlane.f32.xlu0 %v730
    %v732 = vpop.xlane.xlu0 %731
    %v733 = vsel %vm278, %v729, 0.0
    %734 = vadd.xlane.f32.xlu0 %v733
    %v735 = vpop.xlane.xlu0 %734
    %v736 = vrcp.pop %v732
    %v737 = vrcp.pop %v735
    %v738 = vmul.f32 %v727, %v736
    %v739 = vmul.f32 %v729, %v737
    %740 = vrot.lane.b32.xlu0 %v142, 104
    %v741 = vpop.permute.xlu0 %740
    %v744 = vsel %vm278, %v738, 0
    %746 = vmatpush.msra.mxu0 0.0
    %747 = vmatpush.msra.mxu0 0.0
    %748 = vmatpush.msra.mxu0 0.0
    %749 = vmatpush.msra.mxu0 0.0
    %750 = vmatpush.msra.mxu0 0.0
    %751 = vmatpush.msra.mxu0 0.0
    %752 = vmatpush.msra.mxu0 0.0
    %753 = vmatpush.msra.mxu0 0.0
    %754 = vmatpush.msra.mxu0 0.0
    %755 = vmatpush.msra.mxu0 0.0
    %756 = vmatpush.msra.mxu0 0.0
    %757 = vmatpush.msra.mxu0 0.0
    %758 = vmatpush.msra.mxu0 0.0
    %759 = vmatpush.msra.mxu0 0.0
    %760 = vmatpush.msra.mxu0 0.0
    %761 = vmatpush.msra.mxu0 %v741
    %762 = vmatmul.f32.gmra.mxu0 %v744
    %v763 = vpop.f32.mrf.mxu0
    %v764 = vadd.f32 0.0, %v763
    %765 = vdwg.mxu0
    %766 = vrot.lane.b32.xlu0 %v145, 104
    %v767 = vpop.permute.xlu0 %766
    %v770 = vsel %vm278, %v739, 0
    %772 = vmatpush.msra.mxu0 0.0
    %773 = vmatpush.msra.mxu0 0.0
    %774 = vmatpush.msra.mxu0 0.0
    %775 = vmatpush.msra.mxu0 0.0
    %776 = vmatpush.msra.mxu0 0.0
    %777 = vmatpush.msra.mxu0 0.0
    %778 = vmatpush.msra.mxu0 0.0
    %779 = vmatpush.msra.mxu0 0.0
    %780 = vmatpush.msra.mxu0 0.0
    %781 = vmatpush.msra.mxu0 0.0
    %782 = vmatpush.msra.mxu0 0.0
    %783 = vmatpush.msra.mxu0 0.0
    %784 = vmatpush.msra.mxu0 0.0
    %785 = vmatpush.msra.mxu0 0.0
    %786 = vmatpush.msra.mxu0 0.0
    %787 = vmatpush.msra.mxu0 %v767
    %788 = vmatmul.f32.gmra.mxu0 %v770
    %v789 = vpop.f32.mrf.mxu0
    %v790 = vadd.f32 0.0, %v789
    %791 = vdwg.mxu0
    %794 = vrot.lane.b32.xlu0 %v503, 8
    %v795 = vpop.permute.xlu0 %794
    %796 = vrot.lane.b32.xlu0 %v530, 8
    %v797 = vpop.permute.xlu0 %796
    %802 = vrot.lane.b32.xlu0 %v634, 16
    %v803 = vpop.permute.xlu0 %802
    %804 = vrot.lane.b32.xlu0 %v660, 16
    %v805 = vpop.permute.xlu0 %804
    %810 = vrot.lane.b32.xlu0 %v764, 24
    %v811 = vpop.permute.xlu0 %810
    %812 = vrot.lane.b32.xlu0 %v790, 24
    %v813 = vpop.permute.xlu0 %812
    %v816 = vsel %vm278, %v375, %v795
    %v817 = vsel %vm278, %v398, %v797
    %vm818 = vcmask 130048
    %v819 = vsel %vm818, %v816, %v803
    %v820 = vsel %vm818, %v817, %v805
    %vm821 = vcmask 195584
    %v822 = vsel %vm821, %v819, %v811
    %v823 = vsel %vm821, %v820, %v813
    %v825 = vsel %vm23, %v822, 0
    %v828 = vsel %vm23, %v823, 0
    %830 = vmatpush.msra.mxu0 0.0
    %831 = vmatpush.msra.mxu0 0.0
    %832 = vmatpush.msra.mxu0 0.0
    %833 = vmatpush.msra.mxu0 0.0
    %834 = vmatpush.msra.mxu0 0.0
    %835 = vmatpush.msra.mxu0 0.0
    %836 = vmatpush.msra.mxu0 0.0
    %837 = vmatpush.msra.mxu0 0.0
    %838 = vmatpush.msra.mxu0 0.0
    %839 = vmatpush.msra.mxu0 0.0
    %840 = vmatpush.msra.mxu0 0.0
    %841 = vmatpush.msra.mxu0 0.0
    %842 = vmatpush.msra.mxu0 %v225
    %843 = vmatpush.msra.mxu0 %v224
    %844 = vmatpush.msra.mxu0 %v223
    %845 = vmatpush.msra.mxu0 %v222
    %846 = vmatmul.f32.gmra.mxu0 %v825
    %v847 = vpop.f32.mrf.mxu0
    %v848 = vadd.f32 0.0, %v847
    %849 = vmatmul.f32.gmra.mxu0 %v828
    %v850 = vpop.f32.mrf.mxu0
    %v851 = vadd.f32 0.0, %v850
    %852 = vdwg.mxu0
    %v853 = vadd.f32 %v273, %v848
    %v854 = vadd.f32 %v274, %v851
    %855 = vst.msk [vmem:[#allocation2] sm:$0xff] %vm23, %v853
    %856 = vst.msk [vmem:[#allocation2 + $0x8] sm:$0xff] %vm23, %v854
    // Predicated region
    $region22: #{tpu_custom_call.1} parent=1 // pred_check
      _
    $region23: #{tpu_custom_call.1} parent=1 // pred_check_branch
      %858 = sbr.rel (0) target = $region25
    $region24: #{tpu_custom_call.1} parent=1 // pred_region
      %860 = vsyncadd [#allocation3], 0
      %s861 = sshll.u32 [#allocation2], 4
      %s862 = int_to_ptr.vmem [resolvable:$true] %s861
      %s863 = sshll.u32 %s5, 4
      %s864 = int_to_ptr.hbm [resolvable:$true] %s863
      %869 = dma.vmem_to_hbm [thread:$0]  %s862, 256, %s864, [#allocation3], 128, 128, 8
    $region25: #{tpu_custom_call.1} parent=1 // pred_fallthru
      _
    // Predicated region
    $region26: #{tpu_custom_call.1} parent=1 // pred_check
      _
    $region27: #{tpu_custom_call.1} parent=1 // pred_check_branch
      %871 = sbr.rel (0) target = $region29
    $region28: #{tpu_custom_call.1} parent=1 // pred_region
      %873 = dma.done [#allocation3], 256
    $region29: #{tpu_custom_call.1} parent=1 // pred_fallthru
      _
    %874 = vsyncpa [#allocation3], 1

</llo_original>
